<compile_context>
chip_gen: v5e
topology: v5e:2x2
jax: 0.10.0
libtpu: 0.0.40
codegen_flags: <defaults>
</compile_context>

<pallas_src>
import functools

import jax
import jax.numpy as jnp
from jax.experimental import pallas as pl
from jax.experimental.pallas import tpu as pltpu


def _gelu_tanh(x):
    # BERT-style tanh GELU approximation (layerUtils.GELU), computed in f32.
    c = jnp.sqrt(jnp.asarray(2.0 / jnp.pi, dtype=x.dtype))
    return 0.5 * x * (1.0 + jnp.tanh(c * (x + 0.044715 * x * x * x)))


def _round_up(n, m):
    return ((n + m - 1) // m) * m


def _vmem_capacity_bytes():
    try:
        return int(pltpu.get_tpu_info().vmem_capacity_bytes)
    except Exception:
        return 64 << 20  # conservative (v7x-sized) fallback


# ----------------------------- kernels ---------------------------------------


def ffn_kernel_resident(x_ref, w1_ref, b1_ref, w2_ref, b2_ref, o_ref):
    # Weights fully VMEM-resident (constant index_map): single pass over d_ff,
    # no accumulator scratch, direct store.
    h = jnp.dot(x_ref[...], w1_ref[...], preferred_element_type=jnp.float32)
    h = h + b1_ref[...].astype(jnp.float32)            # (1, d_ff) broadcast, f32
    g = _gelu_tanh(h)                                  # GELU in f32
    # Dropout: identity (eval mode).
    out = jnp.dot(g.astype(w2_ref.dtype), w2_ref[...],
                  preferred_element_type=jnp.float32)
    o_ref[...] = (out + b2_ref[...].astype(jnp.float32)).astype(o_ref.dtype)


def ffn_kernel_ftiled(x_ref, w1_ref, b1_ref, w2_ref, b2_ref, o_ref, acc_ref):
    f = pl.program_id(1)

    @pl.when(f == 0)
    def _init():
        acc_ref[...] = jnp.zeros_like(acc_ref)

    # First matmul in the operands' native dtype (bf16 feeds the MXU directly),
    # with f32 accumulation.
    h = jnp.dot(x_ref[...], w1_ref[...], preferred_element_type=jnp.float32)
    h = h + b1_ref[...].astype(jnp.float32)
    g = _gelu_tanh(h)
    # Dropout: identity (eval mode).
    acc_ref[...] += jnp.dot(g.astype(w2_ref.dtype), w2_ref[...],
                            preferred_element_type=jnp.float32)

    @pl.when(f == pl.num_programs(1) - 1)
    def _finalize():
        out = acc_ref[...] + b2_ref[...].astype(jnp.float32)   # b2 added exactly once
        o_ref[...] = out.astype(o_ref.dtype)


# ----------------------------- wrapper ----------------------------------------


@functools.partial(jax.jit, static_argnames=("tile_m", "tile_f", "force_path"))
def position_wise_ffn(x, w1, b1, w2, b2, *, tile_m=None, tile_f=None,
                      force_path="auto"):
    """Forward of PositionWiseFeedForward: W2(GELU(W1 x + b1)) + b2 (dropout = id)."""
    B, S, D = x.shape
    d_ff = w1.shape[1]
    M = B * S
    itemsize = jnp.dtype(x.dtype).itemsize

    vmem_cap = _vmem_capacity_bytes()
    vmem_budget = int(0.85 * vmem_cap)          # never request more than physical VMEM
    small_vmem = vmem_cap <= (64 << 20)         # v7x-class: half the VMEM, 2 TCs/chip

    # Generation-aware defaults: arithmetic intensity of the f-tiled path ~ tile_m.
    tm_target = tile_m if tile_m is not None else (512 if small_vmem else 768)
    tf_target = tile_f if tile_f is not None else (256 if small_vmem else 512)

    x2d = x.reshape(M, D)

    # ---------------- fast path: weights fully VMEM-resident ------------------
    w_bytes = (D * d_ff + d_ff + d_ff * D + D) * itemsize

    def _fast_need(t):
        # 2x for Pallas double-buffering of every spec + f32 (tm, d_ff) h/g
        # intermediates + headroom.
        return 2 * (w_bytes + 2 * t * D * itemsize) + 2 * t * d_ff * 4 + (2 << 20)

    tm_fast = None
    if force_path != "ftiled" and 2 * w_bytes <= (vmem_budget * 5) // 8:
        t = min(tm_target, _round_up(M, 8))
        while True:
            if _fast_need(t) <= vmem_budget:
                tm_fast = t
                break
            if t <= 8:
                break
            t = max(8, _round_up(t // 2, 8))

    if tm_fast is not None:
        tm = tm_fast
        # >= 2 token tiles when possible so both v7x TensorCores get work.
        if M > 8 and _round_up(M, tm) // tm < 2:
            tm = max(8, _round_up(-(-M // 2), 8))
        Mp = _round_up(M, tm)
        n_m = Mp // tm
        if Mp != M:
            x2d = jnp.pad(x2d, ((0, Mp - M), (0, 0)))

        cost = pl.CostEstimate(
            flops=4 * M * D * d_ff,
            transcendentals=M * d_ff,
            bytes_accessed=int(itemsize * (2 * M * D + 2 * D * d_ff + d_ff + D)),
        )
        out2d = pl.pallas_call(
            ffn_kernel_resident,
            out_shape=jax.ShapeDtypeStruct((Mp, D), x.dtype),
            grid_spec=pltpu.PrefetchScalarGridSpec(
                num_scalar_prefetch=0,
                grid=(n_m,),
                in_specs=[
                    pl.BlockSpec((tm, D), lambda i: (i, 0)),     # x tile (streams once)
                    pl.BlockSpec((D, d_ff), lambda i: (0, 0)),   # W1 resident
                    pl.BlockSpec((1, d_ff), lambda i: (0, 0)),   # b1 resident
                    pl.BlockSpec((d_ff, D), lambda i: (0, 0)),   # W2 resident
                    pl.BlockSpec((1, D), lambda i: (0, 0)),      # b2 resident
                ],
                out_specs=pl.BlockSpec((tm, D), lambda i: (i, 0)),
            ),
            compiler_params=pltpu.CompilerParams(
                dimension_semantics=("parallel",),
                vmem_limit_bytes=int(min(max(_fast_need(tm), 16 << 20), vmem_budget)),
            ),
            cost_estimate=cost,
        )(x2d, w1, b1, w2, b2)
        return out2d[:M].reshape(B, S, D)

    # ---------------- fallback: d_ff-tiled accumulation path ------------------
    # tile_f is chosen as a divisor of d_ff (multiple of 128), so no per-call
    # weight padding copy for the normal 128-aligned d_ff case.
    if d_ff % 128 == 0:
        tf_cands = sorted((t for t in range(128, d_ff + 1, 128) if d_ff % t == 0),
                          reverse=True)
        tf = next((t for t in tf_cands if t <= tf_target), tf_cands[-1])
        Fp = d_ff
    else:
        # TODO(synk): pre-pad weights once at parameter-init time to avoid this
        # per-call HBM copy (rare: d_ff not a multiple of 128).
        tf = min(tf_target, _round_up(d_ff, 128))
        Fp = _round_up(d_ff, tf)
        w1 = jnp.pad(w1, ((0, 0), (0, Fp - d_ff)))
        b1 = jnp.pad(b1, ((0, 0), (0, Fp - d_ff)))
        w2 = jnp.pad(w2, ((0, Fp - d_ff), (0, 0)))

    tm = min(tm_target, _round_up(M, 8))
    if M > 8 and _round_up(M, tm) // tm < 2:
        tm = max(8, _round_up(-(-M // 2), 8))

    def _ftiled_need(tm_, tf_):
        # 2x-buffered tiles + f32 accumulator + f32 (tm, tf) h/g intermediates.
        tiles = (tm_ * D + D * tf_ + tf_ + tf_ * D + D + tm_ * D) * itemsize
        return 2 * tiles + tm_ * D * 4 + 2 * tm_ * tf_ * 4 + (2 << 20)

    # Shrink tf first (tm sets arithmetic intensity); shrink tm only as last resort.
    while _ftiled_need(tm, tf) > vmem_budget and tf > 128:
        smaller = [t for t in range(128, tf, 128) if Fp % t == 0]
        if not smaller:
            break
        tf = max(smaller)
    while _ftiled_need(tm, tf) > vmem_budget and tm > 8:
        tm = max(8, _round_up(tm // 2, 8))

    Mp = _round_up(M, tm)
    if Mp != M:
        x2d = jnp.pad(x2d, ((0, Mp - M), (0, 0)))
    n_m = Mp // tm
    n_f = Fp // tf

    if n_f == 1:
        # Single d_ff tile: skip the accumulator scratch and its per-step
        # read-modify-write; write o_ref directly.
        kernel = ffn_kernel_resident
        scratch = []
    else:
        kernel = ffn_kernel_ftiled
        scratch = [pltpu.VMEM((tm, D), jnp.float32)]

    cost = pl.CostEstimate(
        flops=4 * M * D * d_ff,
        transcendentals=M * d_ff,
        bytes_accessed=int(itemsize * (2 * M * D + n_m * (2 * D * Fp + Fp + D))),
    )
    vmem_bytes = int(min(max(_ftiled_need(tm, tf), 16 << 20), vmem_budget))

    out2d = pl.pallas_call(
        kernel,
        out_shape=jax.ShapeDtypeStruct((Mp, D), x.dtype),
        grid_spec=pltpu.PrefetchScalarGridSpec(
            num_scalar_prefetch=0,
            grid=(n_m, n_f),                                  # reduction (d_ff) axis last
            in_specs=[
                pl.BlockSpec((tm, D), lambda i, f: (i, 0)),   # x tile
                pl.BlockSpec((D, tf), lambda i, f: (0, f)),   # W1 d_ff tile
                pl.BlockSpec((1, tf), lambda i, f: (0, f)),   # b1 d_ff tile
                pl.BlockSpec((tf, D), lambda i, f: (f, 0)),   # W2 d_ff tile
                pl.BlockSpec((1, D),  lambda i, f: (0, 0)),   # b2 (grid-invariant)
            ],
            out_specs=pl.BlockSpec((tm, D), lambda i, f: (i, 0)),
            scratch_shapes=scratch,
        ),
        compiler_params=pltpu.CompilerParams(
            dimension_semantics=("parallel", "arbitrary"),
            vmem_limit_bytes=vmem_bytes,
        ),
        cost_estimate=cost,
    )(x2d, w1, b1, w2, b2)

    return out2d[:M].reshape(B, S, D)


def reference_ffn(x, w1, b1, w2, b2):
    h = (jnp.einsum("bsd,df->bsf", x.astype(jnp.float32), w1.astype(jnp.float32))
         + b1[0].astype(jnp.float32))
    g = _gelu_tanh(h)
    out = (jnp.einsum("bsf,fd->bsd", g, w2.astype(jnp.float32))
           + b2[0].astype(jnp.float32))
    return out.astype(x.dtype)


if __name__ == "__main__":
    # Small, deterministic config (lane-dense d_model): d_model=128, d_ff=256.
    d_model, d_ff = 128, 256
    batch, seq = 2, 8

    key = jax.random.PRNGKey(0)
    kx, k1, kb1, k2, kb2 = jax.random.split(key, 5)

    x = jax.random.normal(kx, (batch, seq, d_model), dtype=jnp.float32)
    # nn.Linear init scale ~ 1/sqrt(fan_in); deterministic synthetic weights.
    w1 = jax.random.normal(k1, (d_model, d_ff), dtype=jnp.float32) / jnp.sqrt(d_model)
    b1 = jax.random.normal(kb1, (1, d_ff), dtype=jnp.float32) * 0.01
    w2 = jax.random.normal(k2, (d_ff, d_model), dtype=jnp.float32) / jnp.sqrt(d_ff)
    b2 = jax.random.normal(kb2, (1, d_model), dtype=jnp.float32) * 0.01

    ref = reference_ffn(x, w1, b1, w2, b2)

    # Fast path (weights VMEM-resident, grid over token tiles only).
    out_fast = jax.block_until_ready(position_wise_ffn(x, w1, b1, w2, b2))
    assert out_fast.shape == (batch, seq, d_model)
    assert jnp.allclose(out_fast, ref, atol=1e-4, rtol=1e-4), "resident path mismatch"

    # d_ff-tiled fallback (forced; tile_f=128 -> n_f=2 exercises the accumulator).
    out_tiled = jax.block_until_ready(
        position_wise_ffn(x, w1, b1, w2, b2, tile_f=128, force_path="ftiled"))
    assert jnp.allclose(out_tiled, ref, atol=1e-4, rtol=1e-4), "f-tiled path mismatch"

    print("KERNEL_OK")
</pallas_src>

<mosaic_0001>
module attributes {stable_mosaic.version = 11 : i64} {
  func.func @ffn_kernel_resident(%arg0: i32, %arg1: memref<8x128xf32, #tpu.memory_space<vmem>>, %arg2: memref<128x256xf32, #tpu.memory_space<vmem>>, %arg3: memref<1x256xf32, #tpu.memory_space<vmem>>, %arg4: memref<256x128xf32, #tpu.memory_space<vmem>>, %arg5: memref<1x128xf32, #tpu.memory_space<vmem>>, %arg6: memref<8x128xf32, #tpu.memory_space<vmem>>) attributes {dimension_semantics = [#tpu.dimension_semantics<parallel>], iteration_bounds = array<i64: 2>, scalar_prefetch = 0 : i64, scratch_operands = 0 : i64, tpu.core_type = #tpu.core_type<tc>, window_params = [{transform_indices = @transform_0, window_bounds = array<i64: 8, 128>}, {pipeline_mode = #tpu.pipeline_mode<synchronous>, transform_indices = @transform_1, window_bounds = array<i64: 128, 256>}, {pipeline_mode = #tpu.pipeline_mode<synchronous>, transform_indices = @transform_2, window_bounds = array<i64: 1, 256>}, {pipeline_mode = #tpu.pipeline_mode<synchronous>, transform_indices = @transform_3, window_bounds = array<i64: 256, 128>}, {pipeline_mode = #tpu.pipeline_mode<synchronous>, transform_indices = @transform_4, window_bounds = array<i64: 1, 128>}, {transform_indices = @transform_5, window_bounds = array<i64: 8, 128>}]} {
    %c0 = arith.constant 0 : index
    %c0_0 = arith.constant 0 : index
    %0 = vector.load %arg1[%c0, %c0_0] : memref<8x128xf32, #tpu.memory_space<vmem>>, vector<8x128xf32>
    %c0_1 = arith.constant 0 : index
    %c0_2 = arith.constant 0 : index
    %1 = vector.load %arg2[%c0_1, %c0_2] : memref<128x256xf32, #tpu.memory_space<vmem>>, vector<128x256xf32>
    %cst = arith.constant dense<0.000000e+00> : vector<8x256xf32>
    %2 = tpu.matmul %0, %1, %cst {dimension_numbers = #tpu.dot_dimension_numbers<[1], [0], [0], [1], [0, 0, 1, 1], [], []>} : vector<8x128xf32>, vector<128x256xf32>, vector<8x256xf32> -> vector<8x256xf32>
    %c0_3 = arith.constant 0 : index
    %c0_4 = arith.constant 0 : index
    %3 = vector.load %arg3[%c0_3, %c0_4] : memref<1x256xf32, #tpu.memory_space<vmem>>, vector<1x256xf32>
    %4 = vector.broadcast %3 : vector<1x256xf32> to vector<8x256xf32>
    %5 = arith.addf %2, %4 : vector<8x256xf32>
    %cst_5 = arith.constant 0.636619746 : f32
    %6 = math.sqrt %cst_5 : f32
    %cst_6 = arith.constant 5.000000e-01 : f32
    %7 = vector.broadcast %cst_6 : f32 to vector<8x256xf32>
    %8 = arith.mulf %7, %5 : vector<8x256xf32>
    %cst_7 = arith.constant 4.471500e-02 : f32
    %9 = vector.broadcast %cst_7 : f32 to vector<8x256xf32>
    %10 = arith.mulf %9, %5 : vector<8x256xf32>
    %11 = arith.mulf %10, %5 : vector<8x256xf32>
    %12 = arith.mulf %11, %5 : vector<8x256xf32>
    %13 = arith.addf %5, %12 : vector<8x256xf32>
    %14 = vector.broadcast %6 : f32 to vector<8x256xf32>
    %15 = arith.mulf %14, %13 : vector<8x256xf32>
    %16 = math.tanh %15 : vector<8x256xf32>
    %cst_8 = arith.constant 1.000000e+00 : f32
    %17 = vector.broadcast %cst_8 : f32 to vector<8x256xf32>
    %18 = arith.addf %17, %16 : vector<8x256xf32>
    %19 = arith.mulf %8, %18 : vector<8x256xf32>
    %c0_9 = arith.constant 0 : index
    %c0_10 = arith.constant 0 : index
    %20 = vector.load %arg4[%c0_9, %c0_10] : memref<256x128xf32, #tpu.memory_space<vmem>>, vector<256x128xf32>
    %cst_11 = arith.constant dense<0.000000e+00> : vector<8x128xf32>
    %21 = tpu.matmul %19, %20, %cst_11 {dimension_numbers = #tpu.dot_dimension_numbers<[1], [0], [0], [1], [0, 0, 1, 1], [], []>} : vector<8x256xf32>, vector<256x128xf32>, vector<8x128xf32> -> vector<8x128xf32>
    %c0_12 = arith.constant 0 : index
    %c0_13 = arith.constant 0 : index
    %22 = vector.load %arg5[%c0_12, %c0_13] : memref<1x128xf32, #tpu.memory_space<vmem>>, vector<1x128xf32>
    %23 = vector.broadcast %22 : vector<1x128xf32> to vector<8x128xf32>
    %24 = arith.addf %21, %23 : vector<8x128xf32>
    %c0_14 = arith.constant 0 : index
    %c0_15 = arith.constant 0 : index
    %25 = vector.load %arg6[%c0_14, %c0_15] : memref<8x128xf32, #tpu.memory_space<vmem>>, vector<8x128xf32>
    tpu.vector_store %arg6[%c0_14, %c0_15], %24 {strides = array<i32>} : memref<8x128xf32, #tpu.memory_space<vmem>>, vector<8x128xf32>,
    return
  }
  func.func @transform_0(%arg0: i32) -> (i32, i32) {
    %c0_i32 = arith.constant 0 : i32
    %c0_i32_0 = arith.constant 0 : i32
    return %arg0, %c0_i32 : i32, i32
  }
  func.func @transform_1(%arg0: i32) -> (i32, i32) {
    %c0_i32 = arith.constant 0 : i32
    %c0_i32_0 = arith.constant 0 : i32
    %c0_i32_1 = arith.constant 0 : i32
    return %c0_i32, %c0_i32_0 : i32, i32
  }
  func.func @transform_2(%arg0: i32) -> (i32, i32) {
    %c0_i32 = arith.constant 0 : i32
    %c0_i32_0 = arith.constant 0 : i32
    %c0_i32_1 = arith.constant 0 : i32
    return %c0_i32, %c0_i32_0 : i32, i32
  }
  func.func @transform_3(%arg0: i32) -> (i32, i32) {
    %c0_i32 = arith.constant 0 : i32
    %c0_i32_0 = arith.constant 0 : i32
    %c0_i32_1 = arith.constant 0 : i32
    return %c0_i32, %c0_i32_0 : i32, i32
  }
  func.func @transform_4(%arg0: i32) -> (i32, i32) {
    %c0_i32 = arith.constant 0 : i32
    %c0_i32_0 = arith.constant 0 : i32
    %c0_i32_1 = arith.constant 0 : i32
    return %c0_i32, %c0_i32_0 : i32, i32
  }
  func.func @transform_5(%arg0: i32) -> (i32, i32) {
    %c0_i32 = arith.constant 0 : i32
    %c0_i32_0 = arith.constant 0 : i32
    return %arg0, %c0_i32 : i32, i32
  }
}

</mosaic_0001>

<llo_original>
// kernel: position_wise_ffn.1
$region0: #{position_wise_ffn.1}
  #allocation0 [shape = 'u32[]', space=smem, size = 0x4, offset = 0x4, fixed_abs, tag = 'smem constant byte address 0x4 - core index']
  #allocation1 [shape = 'u32[72,128]{1,0:T(1,128)}', space=vmem, size = 0x9000, scoped, tag = 'internal scratch']
  %s0 = inlined_call_operand.hbm [shape: f32[16,128], index: 0, kind: input, shape index: {}]
  %s1 = inlined_call_operand.hbm [shape: f32[128,256], index: 1, kind: input, shape index: {}]
  %s2 = inlined_call_operand.vmem [shape: f32[1,256], index: 2, kind: input, shape index: {}]
  %s3 = inlined_call_operand.hbm [shape: f32[256,128], index: 3, kind: input, shape index: {}]
  %s4 = inlined_call_operand.vmem [shape: f32[1,128], index: 4, kind: input, shape index: {}]
  %s5 = inlined_call_operand.hbm [shape: f32[16,128], index: 5, kind: output, shape index: {}]
  %s6 = sld [smem:[#allocation0]]
  $region65: #{position_wise_ffn.1} parent=0
    _
  %s8 = ssub.s32 1, %s6
  %s9 = scalar_select 0, %s8, %s6
  $region1: #{position_wise_ffn.1} parent=0
    #allocation2 [shape = 'u8[8192]{0}', space=vmem, size = 0x2000, scoped, tag = 'input window, operand 0']
    #allocation3 [shape = 's32[2]{0}', space=sflag, size = 0x8, scoped, tag = 'scoped memory for position_wise_ffn.1']
    #allocation4 [shape = 's32[2]{0}', space=sflag, size = 0x8, scoped, tag = 'scoped memory for position_wise_ffn.1']
    #allocation5 [shape = 'u8[131072]{0}', space=vmem, size = 0x20000, scoped, tag = 'input window, operand 1, single buffered']
    #allocation6 [shape = 's32[1]{0}', space=sflag, size = 0x4, scoped, tag = 'scoped memory for position_wise_ffn.1']
    #allocation7 [shape = 'u8[131072]{0}', space=vmem, size = 0x20000, scoped, tag = 'input window, operand 3, single buffered']
    #allocation8 [shape = 'u8[8192]{0}', space=vmem, size = 0x2000, scoped, tag = 'output window, operand 0']
    %10 = vsyncpa [#allocation3], 0
    %s11 = scalar_lea.sflag [#allocation3], 1
    %12 = vsyncpa %s11, 0
    %13 = vsyncpa [#allocation6], 0
    %14 = vsyncpa [#allocation4], 0
    %s15 = scalar_lea.sflag [#allocation4], 1
    %16 = vsyncpa %s15, 0
    loop: start=0, step=1, limit=4
    $region2: #{position_wise_ffn.1} parent=1 // loop_pre_header
      _
    $region3: #{position_wise_ffn.1} parent=1 // loop_header
      %s18 = sphi 0, %s22
      %p19 = scmp.ge.s32.totalorder %s18, 4
      %s28 = sphi 0, %s30
      %s31 = sphi 0, %s28
      %s32 = sphi 0, %s31
      %s48 = sphi 0, %s32
      %s52 = sphi 0, %s52
      %s54 = sphi 0, %s52
      %s55 = sphi 0, %s54
      %s69 = sphi 0, %s55
      %s73 = sphi 0, %s73
      %s75 = sphi 0, %s73
      %s76 = sphi 0, %s75
      %s90 = sphi 0, %s76
      %s94 = sphi 0, %s94
      %s96 = sphi 0, %s94
      %s97 = sphi 0, %s96
      %s111 = sphi 0, %s97
      %s115 = sphi 0, %s115
      %s117 = sphi 0, %s115
      %s118 = sphi 0, %s117
      %s132 = sphi 0, %s118
      %s138 = sphi 0, %s140
      %s141 = sphi 0, %s138
      %s142 = sphi 0, %s141
      %s158 = sphi 0, %s142
    $region4: #{position_wise_ffn.1} parent=1 // loop_header_branch
      %21 = sbr.rel (%p19) target = $region8
    $region5: #{position_wise_ffn.1} parent=1 // loop_body
      %s23 = ssub.s32 %s18, 1
      %s24 = ssub.s32 %s18, 2
      %s25 = sadd.s32 %s18, 1
      %s26 = ssub.s32 %s18, %s25
      %p27 = scmp.eq.s32.totalorder %s26, 0
      %s29 = sadd.s32 %s28, 1
      %s30 = scalar_select %p27, %s28, %s29
      %p33 = pneg %p27
      %p34 = scmp.eq.s32.totalorder %s18, 1
      %p35 = por %p33, %p34
      %p36 = scmp.ne.s32.totalorder %s28, %s31
      %p37 = scmp.eq.s32.totalorder %s18, 0
      %p38 = por %p36, %p37
      %p39 = scmp.ne.s32.totalorder %s28, %s31
      %p40 = scmp.eq.s32.totalorder %s23, 1
      %p41 = por %p39, %p40
      %p42 = scmp.ne.s32.totalorder %s31, %s32
      %p43 = scmp.eq.s32.totalorder %s23, 0
      %p44 = por %p42, %p43
      %p45 = scmp.ne.s32.totalorder %s31, %s32
      %p46 = scmp.eq.s32.totalorder %s24, 1
      %p47 = por %p45, %p46
      %p49 = scmp.ne.s32.totalorder %s32, %s48
      %p50 = scmp.eq.s32.totalorder %s24, 0
      %p51 = por %p49, %p50
      %s53 = sadd.s32 %s52, 1
      %p56 = scmp.eq.s32.totalorder %s18, 1
      %p57 = scmp.ne.s32.totalorder %s52, %s54
      %p58 = scmp.eq.s32.totalorder %s18, 0
      %p59 = por %p57, %p58
      %p60 = scmp.ne.s32.totalorder %s52, %s54
      %p61 = scmp.eq.s32.totalorder %s23, 1
      %p62 = por %p60, %p61
      %p63 = scmp.ne.s32.totalorder %s54, %s55
      %p64 = scmp.eq.s32.totalorder %s23, 0
      %p65 = por %p63, %p64
      %p66 = scmp.ne.s32.totalorder %s54, %s55
      %p67 = scmp.eq.s32.totalorder %s24, 1
      %p68 = por %p66, %p67
      %p70 = scmp.ne.s32.totalorder %s55, %s69
      %p71 = scmp.eq.s32.totalorder %s24, 0
      %p72 = por %p70, %p71
      %s74 = sadd.s32 %s73, 1
      %p77 = scmp.eq.s32.totalorder %s18, 1
      %p78 = scmp.ne.s32.totalorder %s73, %s75
      %p79 = scmp.eq.s32.totalorder %s18, 0
      %p80 = por %p78, %p79
      %p81 = scmp.ne.s32.totalorder %s73, %s75
      %p82 = scmp.eq.s32.totalorder %s23, 1
      %p83 = por %p81, %p82
      %p84 = scmp.ne.s32.totalorder %s75, %s76
      %p85 = scmp.eq.s32.totalorder %s23, 0
      %p86 = por %p84, %p85
      %p87 = scmp.ne.s32.totalorder %s75, %s76
      %p88 = scmp.eq.s32.totalorder %s24, 1
      %p89 = por %p87, %p88
      %p91 = scmp.ne.s32.totalorder %s76, %s90
      %p92 = scmp.eq.s32.totalorder %s24, 0
      %p93 = por %p91, %p92
      %s95 = sadd.s32 %s94, 1
      %p98 = scmp.eq.s32.totalorder %s18, 1
      %p99 = scmp.ne.s32.totalorder %s94, %s96
      %p100 = scmp.eq.s32.totalorder %s18, 0
      %p101 = por %p99, %p100
      %p102 = scmp.ne.s32.totalorder %s94, %s96
      %p103 = scmp.eq.s32.totalorder %s23, 1
      %p104 = por %p102, %p103
      %p105 = scmp.ne.s32.totalorder %s96, %s97
      %p106 = scmp.eq.s32.totalorder %s23, 0
      %p107 = por %p105, %p106
      %p108 = scmp.ne.s32.totalorder %s96, %s97
      %p109 = scmp.eq.s32.totalorder %s24, 1
      %p110 = por %p108, %p109
      %p112 = scmp.ne.s32.totalorder %s97, %s111
      %p113 = scmp.eq.s32.totalorder %s24, 0
      %p114 = por %p112, %p113
      %s116 = sadd.s32 %s115, 1
      %p119 = scmp.eq.s32.totalorder %s18, 1
      %p120 = scmp.ne.s32.totalorder %s115, %s117
      %p121 = scmp.eq.s32.totalorder %s18, 0
      %p122 = por %p120, %p121
      %p123 = scmp.ne.s32.totalorder %s115, %s117
      %p124 = scmp.eq.s32.totalorder %s23, 1
      %p125 = por %p123, %p124
      %p126 = scmp.ne.s32.totalorder %s117, %s118
      %p127 = scmp.eq.s32.totalorder %s23, 0
      %p128 = por %p126, %p127
      %p129 = scmp.ne.s32.totalorder %s117, %s118
      %p130 = scmp.eq.s32.totalorder %s24, 1
      %p131 = por %p129, %p130
      %p133 = scmp.ne.s32.totalorder %s118, %s132
      %p134 = scmp.eq.s32.totalorder %s24, 0
      %p135 = por %p133, %p134
      %s136 = ssub.s32 %s18, %s25
      %p137 = scmp.eq.s32.totalorder %s136, 0
      %s139 = sadd.s32 %s138, 1
      %s140 = scalar_select %p137, %s138, %s139
      %p143 = pneg %p137
      %p144 = scmp.eq.s32.totalorder %s18, 1
      %p145 = por %p143, %p144
      %p146 = scmp.ne.s32.totalorder %s138, %s141
      %p147 = scmp.eq.s32.totalorder %s18, 0
      %p148 = por %p146, %p147
      %p149 = scmp.ne.s32.totalorder %s138, %s141
      %p150 = scmp.eq.s32.totalorder %s23, 1
      %p151 = por %p149, %p150
      %p152 = scmp.ne.s32.totalorder %s141, %s142
      %p153 = scmp.eq.s32.totalorder %s23, 0
      %p154 = por %p152, %p153
      %p155 = scmp.ne.s32.totalorder %s141, %s142
      %p156 = scmp.eq.s32.totalorder %s24, 1
      %p157 = por %p155, %p156
      %p159 = scmp.ne.s32.totalorder %s142, %s158
      %p160 = scmp.eq.s32.totalorder %s24, 0
      %p161 = por %p159, %p160
      %p162 = scmp.le.s32.totalorder 1, %s18
      %p163 = scmp.lt.s32.totalorder %s18, 3
      %p164 = pnand %p162, %p163
      %p165 = pneg %p164
      // Predicated region
      $region9: #{position_wise_ffn.1} parent=5 // pred_check
        _
      $region10: #{position_wise_ffn.1} parent=5 // pred_check_branch
        %167 = sbr.rel (%p164) target = $region12
      $region11: #{position_wise_ffn.1} parent=5 // pred_region
        %s168 = ssub.s32 %s18, 1
        // Predicated region
        $region13: #{position_wise_ffn.1} parent=11 // pred_check
          %p169 = pneg %p65
        $region14: #{position_wise_ffn.1} parent=11 // pred_check_branch
          %171 = sbr.rel (%p169) target = $region16
        $region15: #{position_wise_ffn.1} parent=11 // pred_region
          %173 = vsyncadd [#allocation6], 0
          %s174 = sshll.u32 %s1, 4
          %s175 = int_to_ptr.hbm [resolvable:$true] %s174
          %s176 = sshll.u32 [#allocation5], 4
          %s177 = int_to_ptr.vmem [resolvable:$true] %s176
          %182 = dma.hbm_to_vmem [thread:$0]  %s175, 4096, %s177, [#allocation6], 256, 256, 16
        $region16: #{position_wise_ffn.1} parent=11 // pred_fallthru
          _
        // Predicated region
        $region17: #{position_wise_ffn.1} parent=11 // pred_check
          %p183 = pneg %p86
        $region18: #{position_wise_ffn.1} parent=11 // pred_check_branch
          %185 = sbr.rel (%p183) target = $region20
        $region19: #{position_wise_ffn.1} parent=11 // pred_region
          _
        $region20: #{position_wise_ffn.1} parent=11 // pred_fallthru
          _
        // Predicated region
        $region21: #{position_wise_ffn.1} parent=11 // pred_check
          %p186 = pneg %p107
        $region22: #{position_wise_ffn.1} parent=11 // pred_check_branch
          %188 = sbr.rel (%p186) target = $region24
        $region23: #{position_wise_ffn.1} parent=11 // pred_region
          %190 = vsyncadd [#allocation6], 0
          %s191 = sshll.u32 %s3, 4
          %s192 = int_to_ptr.hbm [resolvable:$true] %s191
          %s193 = sshll.u32 [#allocation7], 4
          %s194 = int_to_ptr.vmem [resolvable:$true] %s193
          %199 = dma.hbm_to_vmem [thread:$0]  %s192, 4096, %s194, [#allocation6], 128, 128, 8
        $region24: #{position_wise_ffn.1} parent=11 // pred_fallthru
          _
        // Predicated region
        $region25: #{position_wise_ffn.1} parent=11 // pred_check
          %p200 = pneg %p128
        $region26: #{position_wise_ffn.1} parent=11 // pred_check_branch
          %202 = sbr.rel (%p200) target = $region28
        $region27: #{position_wise_ffn.1} parent=11 // pred_region
          _
        $region28: #{position_wise_ffn.1} parent=11 // pred_fallthru
          _
      $region12: #{position_wise_ffn.1} parent=5 // pred_fallthru
        _
      %p203 = scmp.lt.s32.totalorder %s18, 2
      // Predicated region
      $region29: #{position_wise_ffn.1} parent=5 // pred_check
        %p204 = pneg %p203
      $region30: #{position_wise_ffn.1} parent=5 // pred_check_branch
        %206 = sbr.rel (%p204) target = $region32
      $region31: #{position_wise_ffn.1} parent=5 // pred_region
        // Predicated region
        $region33: #{position_wise_ffn.1} parent=31 // pred_check
          %p207 = pneg %p38
        $region34: #{position_wise_ffn.1} parent=31 // pred_check_branch
          %209 = sbr.rel (%p207) target = $region36
        $region35: #{position_wise_ffn.1} parent=31 // pred_region
          %s210 = sand.u32 %s28, 1
          %s211 = scalar_lea.sflag [#allocation3], %s210
          %s212 = sand.u32 %s28, 1
          %s213 = smul.addr %s212, 8
          %s214 = scalar_lea.vmem [#allocation2], %s213
          %216 = vsyncadd %s211, 0
          %s217 = smul.addr %s18, 8
          %s218 = scalar_lea.hbm %s0, %s217
          %s220 = sshll.u32 %s218, 4
          %s221 = int_to_ptr.hbm [resolvable:$true] %s220
          %s222 = sshll.u32 %s214, 4
          %s223 = int_to_ptr.vmem [resolvable:$true] %s222
          %225 = dma.hbm_to_vmem [thread:$0]  %s221, 128, %s223, %s211
        $region36: #{position_wise_ffn.1} parent=31 // pred_fallthru
          _
      $region32: #{position_wise_ffn.1} parent=5 // pred_fallthru
        _
      %p226 = scmp.le.s32.totalorder 1, %s18
      %p227 = scmp.lt.s32.totalorder %s18, 3
      %p228 = pnand %p226, %p227
      %p229 = pneg %p228
      // Predicated region
      $region37: #{position_wise_ffn.1} parent=5 // pred_check
        _
      $region38: #{position_wise_ffn.1} parent=5 // pred_check_branch
        %231 = sbr.rel (%p228) target = $region40
      $region39: #{position_wise_ffn.1} parent=5 // pred_region
        %s232 = ssub.s32 %s18, 1
        %s233 = sand.u32 %s31, 1
        %s234 = scalar_lea.sflag [#allocation3], %s233
        %s235 = sand.u32 %s31, 1
        %s236 = smul.addr %s235, 8
        %s237 = scalar_lea.vmem [#allocation2], %s236
        // Predicated region
        $region41: #{position_wise_ffn.1} parent=39 // pred_check
          %p238 = pneg %p44
        $region42: #{position_wise_ffn.1} parent=39 // pred_check_branch
          %240 = sbr.rel (%p238) target = $region44
        $region43: #{position_wise_ffn.1} parent=39 // pred_region
          %242 = dma.done %s234, 128
        $region44: #{position_wise_ffn.1} parent=39 // pred_fallthru
          _
        // Predicated region
        $region45: #{position_wise_ffn.1} parent=39 // pred_check
          %p243 = pneg %p65
        $region46: #{position_wise_ffn.1} parent=39 // pred_check_branch
          %245 = sbr.rel (%p243) target = $region48
        $region47: #{position_wise_ffn.1} parent=39 // pred_region
          %247 = dma.done [#allocation6], 4096
        $region48: #{position_wise_ffn.1} parent=39 // pred_fallthru
          _
        // Predicated region
        $region49: #{position_wise_ffn.1} parent=39 // pred_check
          %p248 = pneg %p107
        $region50: #{position_wise_ffn.1} parent=39 // pred_check_branch
          %250 = sbr.rel (%p248) target = $region52
        $region51: #{position_wise_ffn.1} parent=39 // pred_region
          %252 = dma.done [#allocation6], 4096
        $region52: #{position_wise_ffn.1} parent=39 // pred_fallthru
          _
        %s253 = sand.u32 %s31, 1
        %s254 = scalar_lea.sflag [#allocation3], %s253
        %s255 = sand.u32 %s31, 1
        %s256 = smul.addr %s255, 8
        %s257 = scalar_lea.vmem [#allocation2], %s256
        %p258 = pneg %p44
        %p259 = pneg %p41
        %p260 = pneg %p65
        %p261 = pneg %p62
        %p262 = pneg %p86
        %p263 = pneg %p83
        %p264 = pneg %p107
        %p265 = pneg %p104
        %p266 = pneg %p128
        %p267 = pneg %p125
        %p268 = pneg %p154
        %p269 = pneg %p151
        %s270 = sand.u32 %s141, 1
        %s271 = scalar_lea.sflag [#allocation4], %s270
        %s272 = sand.u32 %s141, 1
        %s273 = smul.addr %s272, 8
        %s274 = scalar_lea.vmem [#allocation8], %s273
        %v275 = vld [vmem:[%s237] sm:$0xff]
        %v276 = vld [vmem:[#allocation5] sm:$0xff]
        %v277 = vld [vmem:[#allocation5 + $0x8] sm:$0xff]
        %v278 = vld [vmem:[#allocation5 + $0x10] sm:$0xff]
        %v279 = vld [vmem:[#allocation5 + $0x18] sm:$0xff]
        %v280 = vld [vmem:[#allocation5 + $0x20] sm:$0xff]
        %v281 = vld [vmem:[#allocation5 + $0x28] sm:$0xff]
        %v282 = vld [vmem:[#allocation5 + $0x30] sm:$0xff]
        %v283 = vld [vmem:[#allocation5 + $0x38] sm:$0xff]
        %v284 = vld [vmem:[#allocation5 + $0x40] sm:$0xff]
        %v285 = vld [vmem:[#allocation5 + $0x48] sm:$0xff]
        %v286 = vld [vmem:[#allocation5 + $0x50] sm:$0xff]
        %v287 = vld [vmem:[#allocation5 + $0x58] sm:$0xff]
        %v288 = vld [vmem:[#allocation5 + $0x60] sm:$0xff]
        %v289 = vld [vmem:[#allocation5 + $0x68] sm:$0xff]
        %v290 = vld [vmem:[#allocation5 + $0x70] sm:$0xff]
        %v291 = vld [vmem:[#allocation5 + $0x78] sm:$0xff]
        %v292 = vld [vmem:[#allocation5 + $0x80] sm:$0xff]
        %v293 = vld [vmem:[#allocation5 + $0x88] sm:$0xff]
        %v294 = vld [vmem:[#allocation5 + $0x90] sm:$0xff]
        %v295 = vld [vmem:[#allocation5 + $0x98] sm:$0xff]
        %v296 = vld [vmem:[#allocation5 + $0xa0] sm:$0xff]
        %v297 = vld [vmem:[#allocation5 + $0xa8] sm:$0xff]
        %v298 = vld [vmem:[#allocation5 + $0xb0] sm:$0xff]
        %v299 = vld [vmem:[#allocation5 + $0xb8] sm:$0xff]
        %v300 = vld [vmem:[#allocation5 + $0xc0] sm:$0xff]
        %v301 = vld [vmem:[#allocation5 + $0xc8] sm:$0xff]
        %v302 = vld [vmem:[#allocation5 + $0xd0] sm:$0xff]
        %v303 = vld [vmem:[#allocation5 + $0xd8] sm:$0xff]
        %v304 = vld [vmem:[#allocation5 + $0xe0] sm:$0xff]
        %v305 = vld [vmem:[#allocation5 + $0xe8] sm:$0xff]
        %v306 = vld [vmem:[#allocation5 + $0xf0] sm:$0xff]
        %v307 = vld [vmem:[#allocation5 + $0xf8] sm:$0xff]
        %v308 = vld [vmem:[%s2] sm:$0x3]
        %v310 = vperm.slane %v308, 0
        %v311 = vperm.slane %v308, 1
        %314 = vmatpush.msra.mxu0 %v306
        %315 = vmatpush.msra.mxu0 %v304
        %316 = vmatpush.msra.mxu0 %v302
        %317 = vmatpush.msra.mxu0 %v300
        %318 = vmatpush.msra.mxu0 %v298
        %319 = vmatpush.msra.mxu0 %v296
        %320 = vmatpush.msra.mxu0 %v294
        %321 = vmatpush.msra.mxu0 %v292
        %322 = vmatpush.msra.mxu0 %v290
        %323 = vmatpush.msra.mxu0 %v288
        %324 = vmatpush.msra.mxu0 %v286
        %325 = vmatpush.msra.mxu0 %v284
        %326 = vmatpush.msra.mxu0 %v282
        %327 = vmatpush.msra.mxu0 %v280
        %328 = vmatpush.msra.mxu0 %v278
        %329 = vmatpush.msra.mxu0 %v276
        %330 = vmatmul.f32.gmra.mxu0 %v275
        %v331 = vpop.f32.mrf.mxu0
        %v332 = vadd.f32 %v310, %v331
        %333 = vdwg.mxu0
        %334 = vmatpush.msra.mxu0 %v307
        %335 = vmatpush.msra.mxu0 %v305
        %336 = vmatpush.msra.mxu0 %v303
        %337 = vmatpush.msra.mxu0 %v301
        %338 = vmatpush.msra.mxu0 %v299
        %339 = vmatpush.msra.mxu0 %v297
        %340 = vmatpush.msra.mxu0 %v295
        %341 = vmatpush.msra.mxu0 %v293
        %342 = vmatpush.msra.mxu0 %v291
        %343 = vmatpush.msra.mxu0 %v289
        %344 = vmatpush.msra.mxu0 %v287
        %345 = vmatpush.msra.mxu0 %v285
        %346 = vmatpush.msra.mxu0 %v283
        %347 = vmatpush.msra.mxu0 %v281
        %348 = vmatpush.msra.mxu0 %v279
        %349 = vmatpush.msra.mxu0 %v277
        %350 = vmatmul.f32.gmra.mxu0 %v275
        %v351 = vpop.f32.mrf.mxu0
        %v352 = vadd.f32 %v311, %v351
        %353 = vdwg.mxu0
        %v354 = vmul.f32 %v332, 0.5
        %v355 = vmul.f32 %v352, 0.5
        %v356 = vmul.f32 %v332, 0.044715
        %v357 = vmul.f32 %v352, 0.044715
        %v358 = vmul.f32 %v356, %v332
        %v359 = vmul.f32 %v357, %v352
        %v360 = vmul.f32 %v358, %v332
        %v361 = vmul.f32 %v359, %v352
        %v362 = vadd.f32 %v332, %v360
        %v363 = vadd.f32 %v352, %v361
        %v364 = vmul.f32 %v362, 0.7978845
        %v365 = vmul.f32 %v363, 0.7978845
        %v366 = vtanh.pop %v364
        %v367 = vtanh.pop %v365
        %v368 = vadd.f32 %v366, 1.0
        %v369 = vadd.f32 %v367, 1.0
        %v370 = vmul.f32 %v354, %v368
        %v371 = vmul.f32 %v355, %v369
        %v372 = vld [vmem:[#allocation7] sm:$0xff]
        %v373 = vld [vmem:[#allocation7 + $0x8] sm:$0xff]
        %v374 = vld [vmem:[#allocation7 + $0x10] sm:$0xff]
        %v375 = vld [vmem:[#allocation7 + $0x18] sm:$0xff]
        %v376 = vld [vmem:[#allocation7 + $0x20] sm:$0xff]
        %v377 = vld [vmem:[#allocation7 + $0x28] sm:$0xff]
        %v378 = vld [vmem:[#allocation7 + $0x30] sm:$0xff]
        %v379 = vld [vmem:[#allocation7 + $0x38] sm:$0xff]
        %v380 = vld [vmem:[#allocation7 + $0x40] sm:$0xff]
        %v381 = vld [vmem:[#allocation7 + $0x48] sm:$0xff]
        %v382 = vld [vmem:[#allocation7 + $0x50] sm:$0xff]
        %v383 = vld [vmem:[#allocation7 + $0x58] sm:$0xff]
        %v384 = vld [vmem:[#allocation7 + $0x60] sm:$0xff]
        %v385 = vld [vmem:[#allocation7 + $0x68] sm:$0xff]
        %v386 = vld [vmem:[#allocation7 + $0x70] sm:$0xff]
        %v387 = vld [vmem:[#allocation7 + $0x78] sm:$0xff]
        %v388 = vld [vmem:[#allocation7 + $0x80] sm:$0xff]
        %v389 = vld [vmem:[#allocation7 + $0x88] sm:$0xff]
        %v390 = vld [vmem:[#allocation7 + $0x90] sm:$0xff]
        %v391 = vld [vmem:[#allocation7 + $0x98] sm:$0xff]
        %v392 = vld [vmem:[#allocation7 + $0xa0] sm:$0xff]
        %v393 = vld [vmem:[#allocation7 + $0xa8] sm:$0xff]
        %v394 = vld [vmem:[#allocation7 + $0xb0] sm:$0xff]
        %v395 = vld [vmem:[#allocation7 + $0xb8] sm:$0xff]
        %v396 = vld [vmem:[#allocation7 + $0xc0] sm:$0xff]
        %v397 = vld [vmem:[#allocation7 + $0xc8] sm:$0xff]
        %v398 = vld [vmem:[#allocation7 + $0xd0] sm:$0xff]
        %v399 = vld [vmem:[#allocation7 + $0xd8] sm:$0xff]
        %v400 = vld [vmem:[#allocation7 + $0xe0] sm:$0xff]
        %v401 = vld [vmem:[#allocation7 + $0xe8] sm:$0xff]
        %v402 = vld [vmem:[#allocation7 + $0xf0] sm:$0xff]
        %v403 = vld [vmem:[#allocation7 + $0xf8] sm:$0xff]
        %v404 = vld [vmem:[%s4] sm:$0x1]
        %v406 = vperm.slane %v404, 0
        %408 = vmatpush.msra.mxu0 %v387
        %409 = vmatpush.msra.mxu0 %v386
        %410 = vmatpush.msra.mxu0 %v385
        %411 = vmatpush.msra.mxu0 %v384
        %412 = vmatpush.msra.mxu0 %v383
        %413 = vmatpush.msra.mxu0 %v382
        %414 = vmatpush.msra.mxu0 %v381
        %415 = vmatpush.msra.mxu0 %v380
        %416 = vmatpush.msra.mxu0 %v379
        %417 = vmatpush.msra.mxu0 %v378
        %418 = vmatpush.msra.mxu0 %v377
        %419 = vmatpush.msra.mxu0 %v376
        %420 = vmatpush.msra.mxu0 %v375
        %421 = vmatpush.msra.mxu0 %v374
        %422 = vmatpush.msra.mxu0 %v373
        %423 = vmatpush.msra.mxu0 %v372
        %424 = vmatmul.f32.gmra.mxu0 %v370
        %v425 = vpop.f32.mrf.mxu0
        %v426 = vadd.f32 %v406, %v425
        %427 = vdwg.mxu0
        %428 = vmatpush.msra.mxu0 %v403
        %429 = vmatpush.msra.mxu0 %v402
        %430 = vmatpush.msra.mxu0 %v401
        %431 = vmatpush.msra.mxu0 %v400
        %432 = vmatpush.msra.mxu0 %v399
        %433 = vmatpush.msra.mxu0 %v398
        %434 = vmatpush.msra.mxu0 %v397
        %435 = vmatpush.msra.mxu0 %v396
        %436 = vmatpush.msra.mxu0 %v395
        %437 = vmatpush.msra.mxu0 %v394
        %438 = vmatpush.msra.mxu0 %v393
        %439 = vmatpush.msra.mxu0 %v392
        %440 = vmatpush.msra.mxu0 %v391
        %441 = vmatpush.msra.mxu0 %v390
        %442 = vmatpush.msra.mxu0 %v389
        %443 = vmatpush.msra.mxu0 %v388
        %444 = vmatmul.f32.gmra.mxu0 %v371
        %v445 = vpop.f32.mrf.mxu0
        %v446 = vadd.f32 %v426, %v445
        %447 = vdwg.mxu0
        %448 = vst [vmem:[%s274] sm:$0xff] %v446
        %s449 = sand.u32 %s141, 1
        %s450 = scalar_lea.sflag [#allocation4], %s449
        %s451 = sand.u32 %s141, 1
        %s452 = smul.addr %s451, 8
        %s453 = scalar_lea.vmem [#allocation8], %s452
        // Predicated region
        $region53: #{position_wise_ffn.1} parent=39 // pred_check
          %p454 = pneg %p151
        $region54: #{position_wise_ffn.1} parent=39 // pred_check_branch
          %456 = sbr.rel (%p454) target = $region56
        $region55: #{position_wise_ffn.1} parent=39 // pred_region
          %458 = vsyncadd %s450, 0
          %s459 = smul.addr %s23, 8
          %s460 = scalar_lea.hbm %s5, %s459
          %s462 = sshll.u32 %s453, 4
          %s463 = int_to_ptr.vmem [resolvable:$true] %s462
          %s464 = sshll.u32 %s460, 4
          %s465 = int_to_ptr.hbm [resolvable:$true] %s464
          %467 = dma.vmem_to_hbm [thread:$0]  %s463, 128, %s465, %s450
        $region56: #{position_wise_ffn.1} parent=39 // pred_fallthru
          _
      $region40: #{position_wise_ffn.1} parent=5 // pred_fallthru
        _
      %p468 = scmp.le.s32.totalorder 2, %s18
      // Predicated region
      $region57: #{position_wise_ffn.1} parent=5 // pred_check
        %p469 = pneg %p468
      $region58: #{position_wise_ffn.1} parent=5 // pred_check_branch
        %471 = sbr.rel (%p469) target = $region60
      $region59: #{position_wise_ffn.1} parent=5 // pred_region
        %s472 = ssub.s32 %s18, 2
        // Predicated region
        $region61: #{position_wise_ffn.1} parent=59 // pred_check
          %p473 = pneg %p157
        $region62: #{position_wise_ffn.1} parent=59 // pred_check_branch
          %475 = sbr.rel (%p473) target = $region64
        $region63: #{position_wise_ffn.1} parent=59 // pred_region
          %s476 = sand.u32 %s142, 1
          %s477 = scalar_lea.sflag [#allocation4], %s476
          %s478 = sand.u32 %s142, 1
          %s479 = smul.addr %s478, 8
          %s480 = scalar_lea.vmem [#allocation8], %s479
          %482 = dma.done %s477, 128
        $region64: #{position_wise_ffn.1} parent=59 // pred_fallthru
          _
      $region60: #{position_wise_ffn.1} parent=5 // pred_fallthru
        _
    $region6: #{position_wise_ffn.1} parent=1 // loop_footer
      %s22 = sadd.s32 1, %s18
    $region7: #{position_wise_ffn.1} parent=1 // loop_footer_branch
      %17 = sbr.rel target = $region3
    $region8: #{position_wise_ffn.1} parent=1 // loop_exit
      _
    %483 = vsyncpa [#allocation3], 1
    %s484 = scalar_lea.sflag [#allocation3], 1
    %485 = vsyncpa %s484, 1
    %486 = vsyncpa [#allocation6], 1
    %487 = vsyncpa [#allocation4], 1
    %s488 = scalar_lea.sflag [#allocation4], 1
    %489 = vsyncpa %s488, 1

</llo_original>
